<compile_context>
chip_gen: v7x
topology: tpu7x:2x2x1
jax: 0.10.0
libtpu: 0.0.40
codegen_flags: <defaults>
</compile_context>

<pallas_src>
import functools

import jax
import jax.numpy as jnp
import numpy as np
from jax import lax
from jax.experimental import pallas as pl
from jax.experimental.pallas import tpu as pltpu

NEG_SLOPE = 0.01   # nn.LeakyReLU default
BN_EPS = 1e-5      # nn.BatchNorm2d default
LANES = 128        # TPU lane width; activations use (rows, 128) lane-dense layout


def _leaky(v):
    # LeakyReLU(0.01): one mul + one max (vs cmp+mul+select).
    return jnp.maximum(v, NEG_SLOPE * v)


def multi_stream_kernel(x_ref, a1_ref, a2_ref, aux_ref, o_ref, *,
                        n_batch, h, ho2, cout, inv_count):
    """x_ref:(N*H,128)  a1_ref/a2_ref:(256,128)  aux_ref:(4,128)  o_ref:(N,Ho2,128)

    Lane layout of activations: lane = w*C + c; lanes beyond W*C are zero.
    aux rows: [conv1 bias tiled, conv2 bias tiled, gamma tiled, beta tiled].
    """
    nh = n_batch * h
    x = x_ref[...]                                                  # (N*H, 128)

    # ---- conv1: both kh taps folded into one 256-deep contraction.
    # Row i of y1 is the conv output for stacked row i; rows straddling a batch
    # boundary are garbage but never feed valid conv2 / BN / output rows.
    x2 = jnp.concatenate([x[:nh - 1, :], x[1:, :]], axis=-1)        # (NH-1, 256)
    y1 = jnp.dot(x2, a1_ref[...], preferred_element_type=jnp.float32) + aux_ref[0:1, :]
    h1 = _leaky(y1)                                                 # (NH-1, 128)

    # ---- conv2, same folding.
    h2 = jnp.concatenate([h1[:nh - 2, :], h1[1:nh - 1, :]], axis=-1)
    y2 = jnp.dot(h2, a2_ref[...], preferred_element_type=jnp.float32) + aux_ref[1:2, :]

    # ---- BatchNorm (training-mode batch statistics), single pass over valid rows.
    # N is tiny & static here; at larger N switch to a lax.fori_loop + scratch.
    row_sum = jnp.zeros((1, LANES), jnp.float32)
    row_sq = jnp.zeros((1, LANES), jnp.float32)
    for nb in range(n_batch):
        yb = y2[nb * h:nb * h + ho2, :]
        row_sum = row_sum + jnp.sum(yb, axis=0, keepdims=True)
        row_sq = row_sq + jnp.sum(yb * yb, axis=0, keepdims=True)

    # Channel reduction across the 128/cout w-blocks via an XLU roll-tree
    # (replaces the former 64 KiB R-matrix matmul). Tail lanes are zero.
    def block_reduce(s):
        k = cout
        while k < LANES:
            s = s + pltpu.roll(s, shift=k, axis=1)
            k *= 2
        return s * inv_count

    mean = block_reduce(row_sum)                  # per-channel, broadcast to all lanes
    mean_sq = block_reduce(row_sq)
    var = mean_sq - mean * mean                   # biased variance (BN training mode)
    inv_std = lax.rsqrt(var + BN_EPS)             # EUP
    scale = aux_ref[2:3, :] * inv_std
    shift = aux_ref[3:4, :] - mean * scale

    for nb in range(n_batch):
        z = y2[nb * h:nb * h + ho2, :] * scale + shift
        o_ref[nb] = _leaky(z)


def pack_params(params, h, w):
    """One-time (init) packing of the module parameters into 3 device arrays."""
    w1, b1, w2, b2, gamma, beta = [np.asarray(p, dtype=np.float32) for p in params]
    cin, cout = w1.shape[2], w1.shape[3]
    ho1, wo1 = h - 1, w - 1
    ho2, wo2 = h - 2, w - 2
    lanes_x, lanes_h1, lanes_y2 = w * cin, wo1 * cout, wo2 * cout
    assert max(lanes_x, lanes_h1, lanes_y2) <= LANES, \
        "single-tile kernel assumes W*C fits in 128 lanes"
    nblk = LANES // cout
    assert LANES % cout == 0 and (nblk & (nblk - 1)) == 0, \
        "roll-tree BN reduction needs 128/cout to be a power of two"
    # TODO(synk): fall back to a small channel-reduction matmul for non-power-of-two cout.

    def banded(wk, in_w, out_w):
        # (2*128, 128): for each kh, a (in_w*ci -> out_w*co) matrix folding both
        # kw taps + channel contraction:  M[kh] = sum_kw kron(shift(kw), W[kh,kw]).
        out = np.zeros((2, LANES, LANES), np.float32)
        for kh in range(2):
            band = sum(np.kron(np.eye(in_w, out_w, k=-kw, dtype=np.float32), wk[kh, kw])
                       for kw in range(2))
            out[kh, :band.shape[0], :band.shape[1]] = band
        return out.reshape(2 * LANES, LANES)       # kh stacked along the contraction axis

    a1 = banded(w1, w, wo1)        # (256, 128)
    a2 = banded(w2, wo1, wo2)      # (256, 128)

    aux = np.zeros((4, LANES), np.float32)
    aux[0, :lanes_h1] = np.tile(b1, wo1)           # conv1 bias (lane-tiled)
    aux[1, :lanes_y2] = np.tile(b2, wo2)           # conv2 bias
    aux[2, :lanes_y2] = np.tile(gamma, wo2)        # BN gamma
    aux[3, :lanes_y2] = np.tile(beta, wo2)         # BN beta
    return jnp.asarray(a1), jnp.asarray(a2), jnp.asarray(aux)


@functools.partial(jax.jit, static_argnames=("cout",))
def multi_stream_forward(x_nchw, a1, a2, aux, *, cout):
    """Forward pass. x_nchw: (N, Cin, H, W) f32 -> (N, Cout, H-2, W-2) f32."""
    n, cin, h, w = x_nchw.shape
    ho2, wo2 = h - 2, w - 2
    lanes_x = w * cin
    lanes_y2 = wo2 * cout
    nh = n * h

    # Lane-dense input slab: (N*H, W*Cin) zero-padded to 128 lanes.
    x_flat = jnp.transpose(x_nchw, (0, 2, 3, 1)).astype(jnp.float32).reshape(nh, lanes_x)
    x_pad = jnp.pad(x_flat, ((0, 0), (0, LANES - lanes_x)))

    kern = functools.partial(multi_stream_kernel, n_batch=n, h=h, ho2=ho2,
                             cout=cout, inv_count=1.0 / (n * ho2 * wo2))
    vmem = pl.BlockSpec(memory_space=pltpu.MemorySpace.VMEM)

    out = pl.pallas_call(
        kern,
        out_shape=jax.ShapeDtypeStruct((n, ho2, LANES), jnp.float32),
        in_specs=[vmem] * 4,
        out_specs=vmem,
    )(x_pad, a1, a2, aux)

    # lane = w*Cout + co  ->  (N, Ho2, Wo2, Cout)  ->  NCHW
    out = out[:, :, :lanes_y2].reshape(n, ho2, wo2, cout)
    return jnp.transpose(out, (0, 3, 1, 2))


def ref_forward(x_nchw, params):
    """Pure-JAX reference (XLA convs) for correctness checking."""
    w1, b1, w2, b2, gamma, beta = params
    x = jnp.transpose(x_nchw, (0, 2, 3, 1)).astype(jnp.float32)
    dn1 = lax.conv_dimension_numbers(x.shape, w1.shape, ("NHWC", "HWIO", "NHWC"))
    y = lax.conv_general_dilated(x, w1, (1, 1), "VALID", dimension_numbers=dn1) + b1
    y = _leaky(y)
    dn2 = lax.conv_dimension_numbers(y.shape, w2.shape, ("NHWC", "HWIO", "NHWC"))
    y = lax.conv_general_dilated(y, w2, (1, 1), "VALID", dimension_numbers=dn2) + b2
    m = jnp.mean(y, axis=(0, 1, 2), keepdims=True)
    v = jnp.mean((y - m) ** 2, axis=(0, 1, 2), keepdims=True)
    y = (y - m) / jnp.sqrt(v + BN_EPS) * gamma + beta
    y = _leaky(y)
    return jnp.transpose(y, (0, 3, 1, 2))


if __name__ == "__main__":
    in_ch, out_ch = 4, 8
    n, h, w = 2, 16, 16

    key = jax.random.PRNGKey(0)
    k_x, k_w1, k_b1, k_w2, k_b2 = jax.random.split(key, 5)

    x = jax.random.normal(k_x, (n, in_ch, h, w), jnp.float32)

    # Deterministic param init (PyTorch-like uniform(-1/sqrt(fan_in), ...)); HWIO layout.
    bound1 = 1.0 / np.sqrt(in_ch * 2 * 2)
    w1 = jax.random.uniform(k_w1, (2, 2, in_ch, out_ch), jnp.float32, -bound1, bound1)
    b1 = jax.random.uniform(k_b1, (out_ch,), jnp.float32, -bound1, bound1)
    bound2 = 1.0 / np.sqrt(out_ch * 2 * 2)
    w2 = jax.random.uniform(k_w2, (2, 2, out_ch, out_ch), jnp.float32, -bound2, bound2)
    b2 = jax.random.uniform(k_b2, (out_ch,), jnp.float32, -bound2, bound2)
    gamma = jnp.ones((out_ch,), jnp.float32)   # BatchNorm2d default weight
    beta = jnp.zeros((out_ch,), jnp.float32)   # BatchNorm2d default bias
    params = (w1, b1, w2, b2, gamma, beta)

    # One-time parameter packing (init-time; off the per-call forward path).
    a1, a2, aux = pack_params(params, h, w)

    out = jax.block_until_ready(multi_stream_forward(x, a1, a2, aux, cout=out_ch))
    ref = jax.block_until_ready(ref_forward(x, params))
    np.testing.assert_allclose(np.asarray(out), np.asarray(ref), rtol=1e-4, atol=1e-4)
    assert out.shape == (n, out_ch, h - 2, w - 2)
    print("KERNEL_OK")
</pallas_src>

<mosaic_0001>
module attributes {stable_mosaic.version = 11 : i64} {
  func.func @multi_stream_kernel(%arg0: memref<32x128xf32, #tpu.memory_space<vmem>>, %arg1: memref<256x128xf32, #tpu.memory_space<vmem>>, %arg2: memref<256x128xf32, #tpu.memory_space<vmem>>, %arg3: memref<4x128xf32, #tpu.memory_space<vmem>>, %arg4: memref<2x14x128xf32, #tpu.memory_space<vmem>>) attributes {dimension_semantics = [], scalar_prefetch = 0 : i64, scratch_operands = 0 : i64, tpu.core_type = #tpu.core_type<tc>} {
    %c0 = arith.constant 0 : index
    %c0_0 = arith.constant 0 : index
    %0 = vector.load %arg0[%c0, %c0_0] : memref<32x128xf32, #tpu.memory_space<vmem>>, vector<32x128xf32>
    %1 = vector.extract_strided_slice %0 {offsets = [0, 0], sizes = [31, 128], strides = [1, 1]} : vector<32x128xf32> to vector<31x128xf32>
    %2 = vector.extract_strided_slice %0 {offsets = [1, 0], sizes = [31, 128], strides = [1, 1]} : vector<32x128xf32> to vector<31x128xf32>
    %3 = tpu.concatenate %1, %2 in 1 : vector<31x128xf32>, vector<31x128xf32> -> vector<31x256xf32>
    %c0_1 = arith.constant 0 : index
    %c0_2 = arith.constant 0 : index
    %4 = vector.load %arg1[%c0_1, %c0_2] : memref<256x128xf32, #tpu.memory_space<vmem>>, vector<256x128xf32>
    %cst = arith.constant dense<0.000000e+00> : vector<31x128xf32>
    %5 = tpu.matmul %3, %4, %cst {dimension_numbers = #tpu.dot_dimension_numbers<[1], [0], [0], [1], [0, 0, 1, 1], [], []>} : vector<31x256xf32>, vector<256x128xf32>, vector<31x128xf32> -> vector<31x128xf32>
    %c0_3 = arith.constant 0 : index
    %c0_4 = arith.constant 0 : index
    %6 = vector.load %arg3[%c0_3, %c0_4] : memref<4x128xf32, #tpu.memory_space<vmem>>, vector<1x128xf32>
    %7 = vector.broadcast %6 : vector<1x128xf32> to vector<31x128xf32>
    %8 = arith.addf %5, %7 : vector<31x128xf32>
    %cst_5 = arith.constant 0.00999999977 : f32
    %9 = vector.broadcast %cst_5 : f32 to vector<31x128xf32>
    %10 = arith.mulf %9, %8 : vector<31x128xf32>
    %11 = arith.maximumf %8, %10 : vector<31x128xf32>
    %12 = vector.extract_strided_slice %11 {offsets = [0, 0], sizes = [30, 128], strides = [1, 1]} : vector<31x128xf32> to vector<30x128xf32>
    %13 = vector.extract_strided_slice %11 {offsets = [1, 0], sizes = [30, 128], strides = [1, 1]} : vector<31x128xf32> to vector<30x128xf32>
    %14 = tpu.concatenate %12, %13 in 1 : vector<30x128xf32>, vector<30x128xf32> -> vector<30x256xf32>
    %c0_6 = arith.constant 0 : index
    %c0_7 = arith.constant 0 : index
    %15 = vector.load %arg2[%c0_6, %c0_7] : memref<256x128xf32, #tpu.memory_space<vmem>>, vector<256x128xf32>
    %cst_8 = arith.constant dense<0.000000e+00> : vector<30x128xf32>
    %16 = tpu.matmul %14, %15, %cst_8 {dimension_numbers = #tpu.dot_dimension_numbers<[1], [0], [0], [1], [0, 0, 1, 1], [], []>} : vector<30x256xf32>, vector<256x128xf32>, vector<30x128xf32> -> vector<30x128xf32>
    %c1 = arith.constant 1 : index
    %c0_9 = arith.constant 0 : index
    %17 = vector.load %arg3[%c1, %c0_9] : memref<4x128xf32, #tpu.memory_space<vmem>>, vector<1x128xf32>
    %18 = vector.broadcast %17 : vector<1x128xf32> to vector<30x128xf32>
    %19 = arith.addf %16, %18 : vector<30x128xf32>
    %cst_10 = arith.constant 0.000000e+00 : f32
    %20 = vector.broadcast %cst_10 : f32 to vector<1x128xf32>
    %cst_11 = arith.constant 0.000000e+00 : f32
    %21 = vector.broadcast %cst_11 : f32 to vector<1x128xf32>
    %22 = vector.extract_strided_slice %19 {offsets = [0, 0], sizes = [14, 128], strides = [1, 1]} : vector<30x128xf32> to vector<14x128xf32>
    %cst_12 = arith.constant dense<0.000000e+00> : vector<128xf32>
    %23 = vector.multi_reduction <add>, %22, %cst_12 [0] : vector<14x128xf32> to vector<128xf32>
    %24 = vector.shape_cast %23 : vector<128xf32> to vector<1x128xf32>
    %25 = arith.addf %20, %24 : vector<1x128xf32>
    %26 = arith.mulf %22, %22 : vector<14x128xf32>
    %cst_13 = arith.constant dense<0.000000e+00> : vector<128xf32>
    %27 = vector.multi_reduction <add>, %26, %cst_13 [0] : vector<14x128xf32> to vector<128xf32>
    %28 = vector.shape_cast %27 : vector<128xf32> to vector<1x128xf32>
    %29 = arith.addf %21, %28 : vector<1x128xf32>
    %30 = vector.extract_strided_slice %19 {offsets = [16, 0], sizes = [14, 128], strides = [1, 1]} : vector<30x128xf32> to vector<14x128xf32>
    %cst_14 = arith.constant dense<0.000000e+00> : vector<128xf32>
    %31 = vector.multi_reduction <add>, %30, %cst_14 [0] : vector<14x128xf32> to vector<128xf32>
    %32 = vector.shape_cast %31 : vector<128xf32> to vector<1x128xf32>
    %33 = arith.addf %25, %32 : vector<1x128xf32>
    %34 = arith.mulf %30, %30 : vector<14x128xf32>
    %cst_15 = arith.constant dense<0.000000e+00> : vector<128xf32>
    %35 = vector.multi_reduction <add>, %34, %cst_15 [0] : vector<14x128xf32> to vector<128xf32>
    %36 = vector.shape_cast %35 : vector<128xf32> to vector<1x128xf32>
    %37 = arith.addf %29, %36 : vector<1x128xf32>
    %c8_i32 = arith.constant 8 : i32
    %38 = tpu.dynamic_rotate %33 by %c8_i32 dim 1 : vector<1x128xf32>, i32 -> vector<1x128xf32>
    %39 = arith.addf %33, %38 : vector<1x128xf32>
    %c16_i32 = arith.constant 16 : i32
    %40 = tpu.dynamic_rotate %39 by %c16_i32 dim 1 : vector<1x128xf32>, i32 -> vector<1x128xf32>
    %41 = arith.addf %39, %40 : vector<1x128xf32>
    %c32_i32 = arith.constant 32 : i32
    %42 = tpu.dynamic_rotate %41 by %c32_i32 dim 1 : vector<1x128xf32>, i32 -> vector<1x128xf32>
    %43 = arith.addf %41, %42 : vector<1x128xf32>
    %c64_i32 = arith.constant 64 : i32
    %44 = tpu.dynamic_rotate %43 by %c64_i32 dim 1 : vector<1x128xf32>, i32 -> vector<1x128xf32>
    %45 = arith.addf %43, %44 : vector<1x128xf32>
    %cst_16 = arith.constant 0.00255102036 : f32
    %46 = vector.broadcast %cst_16 : f32 to vector<1x128xf32>
    %47 = arith.mulf %45, %46 : vector<1x128xf32>
    %c8_i32_17 = arith.constant 8 : i32
    %48 = tpu.dynamic_rotate %37 by %c8_i32_17 dim 1 : vector<1x128xf32>, i32 -> vector<1x128xf32>
    %49 = arith.addf %37, %48 : vector<1x128xf32>
    %c16_i32_18 = arith.constant 16 : i32
    %50 = tpu.dynamic_rotate %49 by %c16_i32_18 dim 1 : vector<1x128xf32>, i32 -> vector<1x128xf32>
    %51 = arith.addf %49, %50 : vector<1x128xf32>
    %c32_i32_19 = arith.constant 32 : i32
    %52 = tpu.dynamic_rotate %51 by %c32_i32_19 dim 1 : vector<1x128xf32>, i32 -> vector<1x128xf32>
    %53 = arith.addf %51, %52 : vector<1x128xf32>
    %c64_i32_20 = arith.constant 64 : i32
    %54 = tpu.dynamic_rotate %53 by %c64_i32_20 dim 1 : vector<1x128xf32>, i32 -> vector<1x128xf32>
    %55 = arith.addf %53, %54 : vector<1x128xf32>
    %cst_21 = arith.constant 0.00255102036 : f32
    %56 = vector.broadcast %cst_21 : f32 to vector<1x128xf32>
    %57 = arith.mulf %55, %56 : vector<1x128xf32>
    %58 = arith.mulf %47, %47 : vector<1x128xf32>
    %59 = arith.subf %57, %58 : vector<1x128xf32>
    %cst_22 = arith.constant 9.99999974E-6 : f32
    %60 = vector.broadcast %cst_22 : f32 to vector<1x128xf32>
    %61 = arith.addf %59, %60 : vector<1x128xf32>
    %62 = math.rsqrt %61 : vector<1x128xf32>
    %c2 = arith.constant 2 : index
    %c0_23 = arith.constant 0 : index
    %63 = vector.load %arg3[%c2, %c0_23] : memref<4x128xf32, #tpu.memory_space<vmem>>, vector<1x128xf32>
    %64 = arith.mulf %63, %62 : vector<1x128xf32>
    %c3 = arith.constant 3 : index
    %c0_24 = arith.constant 0 : index
    %65 = vector.load %arg3[%c3, %c0_24] : memref<4x128xf32, #tpu.memory_space<vmem>>, vector<1x128xf32>
    %66 = arith.mulf %47, %64 : vector<1x128xf32>
    %67 = arith.subf %65, %66 : vector<1x128xf32>
    %68 = vector.extract_strided_slice %19 {offsets = [0, 0], sizes = [14, 128], strides = [1, 1]} : vector<30x128xf32> to vector<14x128xf32>
    %69 = vector.broadcast %64 : vector<1x128xf32> to vector<14x128xf32>
    %70 = arith.mulf %68, %69 : vector<14x128xf32>
    %71 = vector.broadcast %67 : vector<1x128xf32> to vector<14x128xf32>
    %72 = arith.addf %70, %71 : vector<14x128xf32>
    %cst_25 = arith.constant 0.00999999977 : f32
    %73 = vector.broadcast %cst_25 : f32 to vector<14x128xf32>
    %74 = arith.mulf %73, %72 : vector<14x128xf32>
    %75 = arith.maximumf %72, %74 : vector<14x128xf32>
    %c0_26 = arith.constant 0 : index
    %c0_27 = arith.constant 0 : index
    %c0_28 = arith.constant 0 : index
    %76 = vector.load %arg4[%c0_26, %c0_27, %c0_28] : memref<2x14x128xf32, #tpu.memory_space<vmem>>, vector<1x14x128xf32>
    %77 = vector.shape_cast %76 : vector<1x14x128xf32> to vector<14x128xf32>
    %78 = vector.shape_cast %75 : vector<14x128xf32> to vector<1x14x128xf32>
    tpu.vector_store %arg4[%c0_26, %c0_27, %c0_28], %78 {strides = array<i32>} : memref<2x14x128xf32, #tpu.memory_space<vmem>>, vector<1x14x128xf32>,
    %79 = vector.extract_strided_slice %19 {offsets = [16, 0], sizes = [14, 128], strides = [1, 1]} : vector<30x128xf32> to vector<14x128xf32>
    %80 = vector.broadcast %64 : vector<1x128xf32> to vector<14x128xf32>
    %81 = arith.mulf %79, %80 : vector<14x128xf32>
    %82 = vector.broadcast %67 : vector<1x128xf32> to vector<14x128xf32>
    %83 = arith.addf %81, %82 : vector<14x128xf32>
    %cst_29 = arith.constant 0.00999999977 : f32
    %84 = vector.broadcast %cst_29 : f32 to vector<14x128xf32>
    %85 = arith.mulf %84, %83 : vector<14x128xf32>
    %86 = arith.maximumf %83, %85 : vector<14x128xf32>
    %c1_30 = arith.constant 1 : index
    %c0_31 = arith.constant 0 : index
    %c0_32 = arith.constant 0 : index
    %87 = vector.load %arg4[%c1_30, %c0_31, %c0_32] : memref<2x14x128xf32, #tpu.memory_space<vmem>>, vector<1x14x128xf32>
    %88 = vector.shape_cast %87 : vector<1x14x128xf32> to vector<14x128xf32>
    %89 = vector.shape_cast %86 : vector<14x128xf32> to vector<1x14x128xf32>
    tpu.vector_store %arg4[%c1_30, %c0_31, %c0_32], %89 {strides = array<i32>} : memref<2x14x128xf32, #tpu.memory_space<vmem>>, vector<1x14x128xf32>,
    return
  }
}

</mosaic_0001>

<llo_original>
// kernel: multi_stream_forward.1
$region0: #{multi_stream_forward.1}
  #allocation0 [shape = 'u32[]', space=smem, size = 0x4, offset = 0x4, fixed_abs, tag = 'smem constant byte address 0x4 - core index']
  #allocation1 [shape = 'u32[144,128]{1,0:T(1,128)}', space=vmem, size = 0x12000, scoped, tag = 'internal scratch']
  %s0 = inlined_call_operand.vmem [shape: f32[32,128], index: 0, kind: input, shape index: {}]
  %s1 = inlined_call_operand.vmem [shape: f32[256,128], index: 1, kind: input, shape index: {}]
  %s2 = inlined_call_operand.vmem [shape: f32[256,128], index: 2, kind: input, shape index: {}]
  %s3 = inlined_call_operand.vmem [shape: f32[4,128], index: 3, kind: input, shape index: {}]
  %s4 = inlined_call_operand.vmem [shape: f32[2,14,128], index: 4, kind: output, shape index: {}]
  %s5 = sld [smem:[#allocation0]]
  $region26: #{multi_stream_forward.1} parent=0
    _
  %s7 = ssub.s32 1, %s5
  %s8 = scalar_select 0, %s7, %s5
  // Predicated region
  $region2: #{multi_stream_forward.1} parent=0 // pred_check
    _
  $region3: #{multi_stream_forward.1} parent=0 // pred_check_branch
    %10 = sbr.rel (0) target = $region5
  $region4: #{multi_stream_forward.1} parent=0 // pred_region
    _
  $region5: #{multi_stream_forward.1} parent=0 // pred_fallthru
    _
  // Predicated region
  $region6: #{multi_stream_forward.1} parent=0 // pred_check
    _
  $region7: #{multi_stream_forward.1} parent=0 // pred_check_branch
    %12 = sbr.rel (0) target = $region9
  $region8: #{multi_stream_forward.1} parent=0 // pred_region
    _
  $region9: #{multi_stream_forward.1} parent=0 // pred_fallthru
    _
  // Predicated region
  $region10: #{multi_stream_forward.1} parent=0 // pred_check
    _
  $region11: #{multi_stream_forward.1} parent=0 // pred_check_branch
    %14 = sbr.rel (0) target = $region13
  $region12: #{multi_stream_forward.1} parent=0 // pred_region
    _
  $region13: #{multi_stream_forward.1} parent=0 // pred_fallthru
    _
  // Predicated region
  $region14: #{multi_stream_forward.1} parent=0 // pred_check
    _
  $region15: #{multi_stream_forward.1} parent=0 // pred_check_branch
    %16 = sbr.rel (0) target = $region17
  $region16: #{multi_stream_forward.1} parent=0 // pred_region
    _
  $region17: #{multi_stream_forward.1} parent=0 // pred_fallthru
    _
  %v17 = vld [vmem:[%s0] sm:$0xff]
  %v18 = vld [vmem:[%s0 + $0x8] sm:$0xff]
  %v19 = vld [vmem:[%s0 + $0x10] sm:$0xff]
  %v20 = vld [vmem:[%s0 + $0x18] sm:$0xff]
  %vm25 = vcmask 1046528
  %v26 = vrot.slane %v17, 1
  %v27 = vrot.slane %v18, 1
  %v28 = vsel %vm25, %v26, %v27
  %v29 = vrot.slane %v19, 1
  %v30 = vsel %vm25, %v27, %v29
  %v31 = vrot.slane %v20, 1
  %v32 = vsel %vm25, %v29, %v31
  %v37 = vld [vmem:[%s1] sm:$0xff]
  %v38 = vld [vmem:[%s1 + $0x8] sm:$0xff]
  %v39 = vld [vmem:[%s1 + $0x10] sm:$0xff]
  %v40 = vld [vmem:[%s1 + $0x18] sm:$0xff]
  %v41 = vld [vmem:[%s1 + $0x20] sm:$0xff]
  %v42 = vld [vmem:[%s1 + $0x28] sm:$0xff]
  %v43 = vld [vmem:[%s1 + $0x30] sm:$0xff]
  %v44 = vld [vmem:[%s1 + $0x38] sm:$0xff]
  %v45 = vld [vmem:[%s1 + $0x40] sm:$0xff]
  %v46 = vld [vmem:[%s1 + $0x48] sm:$0xff]
  %v47 = vld [vmem:[%s1 + $0x50] sm:$0xff]
  %v48 = vld [vmem:[%s1 + $0x58] sm:$0xff]
  %v49 = vld [vmem:[%s1 + $0x60] sm:$0xff]
  %v50 = vld [vmem:[%s1 + $0x68] sm:$0xff]
  %v51 = vld [vmem:[%s1 + $0x70] sm:$0xff]
  %v52 = vld [vmem:[%s1 + $0x78] sm:$0xff]
  %v53 = vld [vmem:[%s1 + $0x80] sm:$0xff]
  %v54 = vld [vmem:[%s1 + $0x88] sm:$0xff]
  %v55 = vld [vmem:[%s1 + $0x90] sm:$0xff]
  %v56 = vld [vmem:[%s1 + $0x98] sm:$0xff]
  %v57 = vld [vmem:[%s1 + $0xa0] sm:$0xff]
  %v58 = vld [vmem:[%s1 + $0xa8] sm:$0xff]
  %v59 = vld [vmem:[%s1 + $0xb0] sm:$0xff]
  %v60 = vld [vmem:[%s1 + $0xb8] sm:$0xff]
  %v61 = vld [vmem:[%s1 + $0xc0] sm:$0xff]
  %v62 = vld [vmem:[%s1 + $0xc8] sm:$0xff]
  %v63 = vld [vmem:[%s1 + $0xd0] sm:$0xff]
  %v64 = vld [vmem:[%s1 + $0xd8] sm:$0xff]
  %v65 = vld [vmem:[%s1 + $0xe0] sm:$0xff]
  %v66 = vld [vmem:[%s1 + $0xe8] sm:$0xff]
  %v67 = vld [vmem:[%s1 + $0xf0] sm:$0xff]
  %v68 = vld [vmem:[%s1 + $0xf8] sm:$0xff]
  %v69 = vld [vmem:[%s3] sm:$0x1]
  %v70 = vlaneseq
  %v71 = vshrl.u32 %v70, 7
  %v72 = vsub.s32 0, %v71
  %v73 = vrot.slane %v69, %v72
  %74 = vmatprep.subr.mxu0 0.0
  %75 = vmatpush1.msra.mxu0 %v37
  %76 = vmatprep.subr.mxu0 0.0
  %77 = vmatpush1.msra.mxu0 %v38
  %78 = vmatprep.subr.mxu0 0.0
  %79 = vmatpush1.msra.mxu0 %v39
  %80 = vmatprep.subr.mxu0 0.0
  %81 = vmatpush1.msra.mxu0 %v40
  %82 = vmatprep.subr.mxu0 0.0
  %83 = vmatpush1.msra.mxu0 %v41
  %84 = vmatprep.subr.mxu0 0.0
  %85 = vmatpush1.msra.mxu0 %v42
  %86 = vmatprep.subr.mxu0 0.0
  %87 = vmatpush1.msra.mxu0 %v43
  %88 = vmatprep.subr.mxu0 0.0
  %89 = vmatpush1.msra.mxu0 %v44
  %90 = vmatprep.subr.mxu0 0.0
  %91 = vmatpush1.msra.mxu0 %v45
  %92 = vmatprep.subr.mxu0 0.0
  %93 = vmatpush1.msra.mxu0 %v46
  %94 = vmatprep.subr.mxu0 0.0
  %95 = vmatpush1.msra.mxu0 %v47
  %96 = vmatprep.subr.mxu0 0.0
  %97 = vmatpush1.msra.mxu0 %v48
  %98 = vmatprep.subr.mxu0 0.0
  %99 = vmatpush1.msra.mxu0 %v49
  %100 = vmatprep.subr.mxu0 0.0
  %101 = vmatpush1.msra.mxu0 %v50
  %102 = vmatprep.subr.mxu0 0.0
  %103 = vmatpush1.msra.mxu0 %v51
  %104 = vmatprep.subr.mxu0 0.0
  %105 = vmatpush1.msra.mxu0 %v52
  %106 = vmatprep.subr.mxu0 0.0
  %107 = vmatpush1.msra.mxu0 %v53
  %108 = vmatprep.subr.mxu0 0.0
  %109 = vmatpush1.msra.mxu0 %v54
  %110 = vmatprep.subr.mxu0 0.0
  %111 = vmatpush1.msra.mxu0 %v55
  %112 = vmatprep.subr.mxu0 0.0
  %113 = vmatpush1.msra.mxu0 %v56
  %114 = vmatprep.subr.mxu0 0.0
  %115 = vmatpush1.msra.mxu0 %v57
  %116 = vmatprep.subr.mxu0 0.0
  %117 = vmatpush1.msra.mxu0 %v58
  %118 = vmatprep.subr.mxu0 0.0
  %119 = vmatpush1.msra.mxu0 %v59
  %120 = vmatprep.subr.mxu0 0.0
  %121 = vmatpush1.msra.mxu0 %v60
  %122 = vmatprep.subr.mxu0 0.0
  %123 = vmatpush1.msra.mxu0 %v61
  %124 = vmatprep.subr.mxu0 0.0
  %125 = vmatpush1.msra.mxu0 %v62
  %126 = vmatprep.subr.mxu0 0.0
  %127 = vmatpush1.msra.mxu0 %v63
  %128 = vmatprep.subr.mxu0 0.0
  %129 = vmatpush1.msra.mxu0 %v64
  %130 = vmatprep.subr.mxu0 0.0
  %131 = vmatpush1.msra.mxu0 %v65
  %132 = vmatprep.subr.mxu0 0.0
  %133 = vmatpush1.msra.mxu0 %v66
  %134 = vmatprep.subr.mxu0 0.0
  %135 = vmatpush1.msra.mxu0 %v67
  %136 = vmatprep.subr.mxu0 0.0
  %137 = vmatpush1.msra.mxu0 %v68
  %138 = vmatprep.mubr.f32.mxu0 %v28
  %139 = vmatmul.mubr.f32.gmra.mrb[0].mxu0 %v17
  %v140 = vpop.f32.mrb[0].mxu0
  %v141 = vadd.f32 %v73, %v140
  %v142 = vpop.f32.mrb[0].mxu0
  %143 = vmatprep.mubr.f32.mxu0 %v30
  %144 = vmatmul.mubr.f32.gmra.mrb[0].mxu0 %v18
  %v145 = vpop.f32.mrb[0].mxu0
  %v146 = vadd.f32 %v73, %v145
  %v147 = vpop.f32.mrb[0].mxu0
  %148 = vmatprep.mubr.f32.mxu0 %v32
  %149 = vmatmul.mubr.f32.gmra.mrb[0].mxu0 %v19
  %v150 = vpop.f32.mrb[0].mxu0
  %v151 = vadd.f32 %v73, %v150
  %v152 = vpop.f32.mrb[0].mxu0
  %153 = vmatprep.mubr.f32.mxu0 %v31
  %154 = vmatmul.mubr.f32.gmra.mrb[0].mxu0 %v20
  %v155 = vpop.f32.mrb[0].mxu0
  %v156 = vadd.f32 %v73, %v155
  %v157 = vpop.f32.mrb[0].mxu0
  %158 = vdwg.mxu0
  %v159 = vmul.f32 %v141, 0.01
  %v160 = vmul.f32 %v146, 0.01
  %v161 = vmul.f32 %v151, 0.01
  %v162 = vmul.f32 %v156, 0.01
  %v163 = vmax.f32 %v141, %v159
  %v164 = vmax.f32 %v146, %v160
  %v165 = vmax.f32 %v151, %v161
  %v166 = vmax.f32 %v156, %v162
  %v171 = vrot.slane %v163, 1
  %v172 = vrot.slane %v164, 1
  %v173 = vsel %vm25, %v171, %v172
  %v174 = vrot.slane %v165, 1
  %v175 = vsel %vm25, %v172, %v174
  %v176 = vrot.slane %v166, 1
  %v177 = vsel %vm25, %v174, %v176
  %v182 = vld [vmem:[%s2] sm:$0xff]
  %v183 = vld [vmem:[%s2 + $0x8] sm:$0xff]
  %v184 = vld [vmem:[%s2 + $0x10] sm:$0xff]
  %v185 = vld [vmem:[%s2 + $0x18] sm:$0xff]
  %v186 = vld [vmem:[%s2 + $0x20] sm:$0xff]
  %v187 = vld [vmem:[%s2 + $0x28] sm:$0xff]
  %v188 = vld [vmem:[%s2 + $0x30] sm:$0xff]
  %v189 = vld [vmem:[%s2 + $0x38] sm:$0xff]
  %v190 = vld [vmem:[%s2 + $0x40] sm:$0xff]
  %v191 = vld [vmem:[%s2 + $0x48] sm:$0xff]
  %v192 = vld [vmem:[%s2 + $0x50] sm:$0xff]
  %v193 = vld [vmem:[%s2 + $0x58] sm:$0xff]
  %v194 = vld [vmem:[%s2 + $0x60] sm:$0xff]
  %v195 = vld [vmem:[%s2 + $0x68] sm:$0xff]
  %v196 = vld [vmem:[%s2 + $0x70] sm:$0xff]
  %v197 = vld [vmem:[%s2 + $0x78] sm:$0xff]
  %v198 = vld [vmem:[%s2 + $0x80] sm:$0xff]
  %v199 = vld [vmem:[%s2 + $0x88] sm:$0xff]
  %v200 = vld [vmem:[%s2 + $0x90] sm:$0xff]
  %v201 = vld [vmem:[%s2 + $0x98] sm:$0xff]
  %v202 = vld [vmem:[%s2 + $0xa0] sm:$0xff]
  %v203 = vld [vmem:[%s2 + $0xa8] sm:$0xff]
  %v204 = vld [vmem:[%s2 + $0xb0] sm:$0xff]
  %v205 = vld [vmem:[%s2 + $0xb8] sm:$0xff]
  %v206 = vld [vmem:[%s2 + $0xc0] sm:$0xff]
  %v207 = vld [vmem:[%s2 + $0xc8] sm:$0xff]
  %v208 = vld [vmem:[%s2 + $0xd0] sm:$0xff]
  %v209 = vld [vmem:[%s2 + $0xd8] sm:$0xff]
  %v210 = vld [vmem:[%s2 + $0xe0] sm:$0xff]
  %v211 = vld [vmem:[%s2 + $0xe8] sm:$0xff]
  %v212 = vld [vmem:[%s2 + $0xf0] sm:$0xff]
  %v213 = vld [vmem:[%s2 + $0xf8] sm:$0xff]
  %v214 = vld [vmem:[%s3 + $0x1] sm:$0x1]
  %v215 = vlaneseq
  %v216 = vshrl.u32 %v215, 7
  %v217 = vsub.s32 0, %v216
  %v218 = vrot.slane %v214, %v217
  %219 = vmatprep.subr.mxu0 0.0
  %220 = vmatpush1.msra.mxu0 %v182
  %221 = vmatprep.subr.mxu0 0.0
  %222 = vmatpush1.msra.mxu0 %v183
  %223 = vmatprep.subr.mxu0 0.0
  %224 = vmatpush1.msra.mxu0 %v184
  %225 = vmatprep.subr.mxu0 0.0
  %226 = vmatpush1.msra.mxu0 %v185
  %227 = vmatprep.subr.mxu0 0.0
  %228 = vmatpush1.msra.mxu0 %v186
  %229 = vmatprep.subr.mxu0 0.0
  %230 = vmatpush1.msra.mxu0 %v187
  %231 = vmatprep.subr.mxu0 0.0
  %232 = vmatpush1.msra.mxu0 %v188
  %233 = vmatprep.subr.mxu0 0.0
  %234 = vmatpush1.msra.mxu0 %v189
  %235 = vmatprep.subr.mxu0 0.0
  %236 = vmatpush1.msra.mxu0 %v190
  %237 = vmatprep.subr.mxu0 0.0
  %238 = vmatpush1.msra.mxu0 %v191
  %239 = vmatprep.subr.mxu0 0.0
  %240 = vmatpush1.msra.mxu0 %v192
  %241 = vmatprep.subr.mxu0 0.0
  %242 = vmatpush1.msra.mxu0 %v193
  %243 = vmatprep.subr.mxu0 0.0
  %244 = vmatpush1.msra.mxu0 %v194
  %245 = vmatprep.subr.mxu0 0.0
  %246 = vmatpush1.msra.mxu0 %v195
  %247 = vmatprep.subr.mxu0 0.0
  %248 = vmatpush1.msra.mxu0 %v196
  %249 = vmatprep.subr.mxu0 0.0
  %250 = vmatpush1.msra.mxu0 %v197
  %251 = vmatprep.subr.mxu0 0.0
  %252 = vmatpush1.msra.mxu0 %v198
  %253 = vmatprep.subr.mxu0 0.0
  %254 = vmatpush1.msra.mxu0 %v199
  %255 = vmatprep.subr.mxu0 0.0
  %256 = vmatpush1.msra.mxu0 %v200
  %257 = vmatprep.subr.mxu0 0.0
  %258 = vmatpush1.msra.mxu0 %v201
  %259 = vmatprep.subr.mxu0 0.0
  %260 = vmatpush1.msra.mxu0 %v202
  %261 = vmatprep.subr.mxu0 0.0
  %262 = vmatpush1.msra.mxu0 %v203
  %263 = vmatprep.subr.mxu0 0.0
  %264 = vmatpush1.msra.mxu0 %v204
  %265 = vmatprep.subr.mxu0 0.0
  %266 = vmatpush1.msra.mxu0 %v205
  %267 = vmatprep.subr.mxu0 0.0
  %268 = vmatpush1.msra.mxu0 %v206
  %269 = vmatprep.subr.mxu0 0.0
  %270 = vmatpush1.msra.mxu0 %v207
  %271 = vmatprep.subr.mxu0 0.0
  %272 = vmatpush1.msra.mxu0 %v208
  %273 = vmatprep.subr.mxu0 0.0
  %274 = vmatpush1.msra.mxu0 %v209
  %275 = vmatprep.subr.mxu0 0.0
  %276 = vmatpush1.msra.mxu0 %v210
  %277 = vmatprep.subr.mxu0 0.0
  %278 = vmatpush1.msra.mxu0 %v211
  %279 = vmatprep.subr.mxu0 0.0
  %280 = vmatpush1.msra.mxu0 %v212
  %281 = vmatprep.subr.mxu0 0.0
  %282 = vmatpush1.msra.mxu0 %v213
  %283 = vmatprep.mubr.f32.mxu0 %v173
  %284 = vmatmul.mubr.f32.gmra.mrb[0].mxu0 %v163
  %v285 = vpop.f32.mrb[0].mxu0
  %v286 = vadd.f32 %v218, %v285
  %v287 = vpop.f32.mrb[0].mxu0
  %288 = vmatprep.mubr.f32.mxu0 %v175
  %289 = vmatmul.mubr.f32.gmra.mrb[0].mxu0 %v164
  %v290 = vpop.f32.mrb[0].mxu0
  %v291 = vadd.f32 %v218, %v290
  %v292 = vpop.f32.mrb[0].mxu0
  %293 = vmatprep.mubr.f32.mxu0 %v177
  %294 = vmatmul.mubr.f32.gmra.mrb[0].mxu0 %v165
  %v295 = vpop.f32.mrb[0].mxu0
  %v296 = vadd.f32 %v218, %v295
  %v297 = vpop.f32.mrb[0].mxu0
  %298 = vmatprep.mubr.f32.mxu0 %v176
  %299 = vmatmul.mubr.f32.gmra.mrb[0].mxu0 %v166
  %v300 = vpop.f32.mrb[0].mxu0
  %v301 = vadd.f32 %v218, %v300
  %v302 = vpop.f32.mrb[0].mxu0
  %303 = vdwg.mxu0
  %vm304 = vcmask 1045504
  %v305 = vsel %vm304, %v291, 0.0
  %v306 = vadd.f32 %v286, %v305
  %v307 = vrot.slane %v306, 4
  %v308 = vadd.f32 %v306, %v307
  %v309 = vrot.slane %v308, 2
  %v310 = vadd.f32 %v308, %v309
  %v311 = vrot.slane %v310, 1
  %v312 = vadd.f32 %v310, %v311
  %v313 = vadd.f32 %v312, 0.0
  %v314 = vmul.f32 %v286, %v286
  %v315 = vmul.f32 %v291, %v291
  %v316 = vsel %vm304, %v315, 0.0
  %v317 = vadd.f32 %v314, %v316
  %v318 = vrot.slane %v317, 4
  %v319 = vadd.f32 %v317, %v318
  %v320 = vrot.slane %v319, 2
  %v321 = vadd.f32 %v319, %v320
  %v322 = vrot.slane %v321, 1
  %v323 = vadd.f32 %v321, %v322
  %v324 = vadd.f32 %v323, 0.0
  %v325 = vsel %vm304, %v301, 0.0
  %v326 = vadd.f32 %v296, %v325
  %v327 = vrot.slane %v326, 4
  %v328 = vadd.f32 %v326, %v327
  %v329 = vrot.slane %v328, 2
  %v330 = vadd.f32 %v328, %v329
  %v331 = vrot.slane %v330, 1
  %v332 = vadd.f32 %v330, %v331
  %v333 = vadd.f32 %v313, %v332
  %v334 = vmul.f32 %v296, %v296
  %v335 = vmul.f32 %v301, %v301
  %v336 = vsel %vm304, %v335, 0.0
  %v337 = vadd.f32 %v334, %v336
  %v338 = vrot.slane %v337, 4
  %v339 = vadd.f32 %v337, %v338
  %v340 = vrot.slane %v339, 2
  %v341 = vadd.f32 %v339, %v340
  %v342 = vrot.slane %v341, 1
  %v343 = vadd.f32 %v341, %v342
  %v344 = vadd.f32 %v324, %v343
  %345 = vrot.lane.b32.xlu0 %v333, 8
  %v346 = vpop.permute.xlu0 %345
  %v347 = vadd.f32 %v333, %v346
  %348 = vrot.lane.b32.xlu0 %v347, 16
  %v349 = vpop.permute.xlu0 %348
  %v350 = vadd.f32 %v347, %v349
  %351 = vrot.lane.b32.xlu0 %v350, 32
  %v352 = vpop.permute.xlu0 %351
  %v353 = vadd.f32 %v350, %v352
  %354 = vrot.lane.b32.xlu0 %v353, 64
  %v355 = vpop.permute.xlu0 %354
  %v356 = vadd.f32 %v353, %v355
  %v357 = vmul.f32 %v356, 0.0025510204
  %358 = vrot.lane.b32.xlu0 %v344, 8
  %v359 = vpop.permute.xlu0 %358
  %v360 = vadd.f32 %v344, %v359
  %361 = vrot.lane.b32.xlu0 %v360, 16
  %v362 = vpop.permute.xlu0 %361
  %v363 = vadd.f32 %v360, %v362
  %364 = vrot.lane.b32.xlu0 %v363, 32
  %v365 = vpop.permute.xlu0 %364
  %v366 = vadd.f32 %v363, %v365
  %367 = vrot.lane.b32.xlu0 %v366, 64
  %v368 = vpop.permute.xlu0 %367
  %v369 = vadd.f32 %v366, %v368
  %v370 = vmul.f32 %v369, 0.0025510204
  %v371 = vmul.f32 %v357, %v357
  %v372 = vsub.f32 %v370, %v371
  %v373 = vadd.f32 %v372, 1e-05
  %v374 = vrsqrt.pop %v373
  %v375 = vld [vmem:[%s3 + $0x2] sm:$0x1]
  %v376 = vmul.f32 %v375, %v374
  %v377 = vld [vmem:[%s3 + $0x3] sm:$0x1]
  %v378 = vmul.f32 %v357, %v376
  %v379 = vsub.f32 %v377, %v378
  %v380 = vlaneseq
  %v381 = vshrl.u32 %v380, 7
  %v382 = vsub.s32 0, %v381
  %v383 = vrot.slane %v376, %v382
  %v384 = vmul.f32 %v286, %v383
  %v385 = vmul.f32 %v291, %v383
  %v386 = vlaneseq
  %v387 = vshrl.u32 %v386, 7
  %v388 = vsub.s32 0, %v387
  %v389 = vrot.slane %v379, %v388
  %v390 = vadd.f32 %v384, %v389
  %v391 = vadd.f32 %v385, %v389
  %v392 = vmul.f32 %v390, 0.01
  %v393 = vmul.f32 %v391, 0.01
  %v394 = vmax.f32 %v390, %v392
  %v395 = vmax.f32 %v391, %v393
  %396 = vst [vmem:[%s4] sm:$0xff] %v394
  %397 = vst [vmem:[%s4 + $0x8] sm:$0x3f] %v395
  %v398 = vmul.f32 %v296, %v383
  %v399 = vmul.f32 %v301, %v383
  %v400 = vadd.f32 %v398, %v389
  %v401 = vadd.f32 %v399, %v389
  %v402 = vmul.f32 %v400, 0.01
  %v403 = vmul.f32 %v401, 0.01
  %v404 = vmax.f32 %v400, %v402
  %v405 = vmax.f32 %v401, %v403
  %s406 = scalar_lea.vmem %s4, 16
  %407 = vst [vmem:[%s406] sm:$0xff] %v404
  %408 = vst [vmem:[%s406 + $0x8] sm:$0x3f] %v405
  // Predicated region
  $region18: #{multi_stream_forward.1} parent=0 // pred_check
    _
  $region19: #{multi_stream_forward.1} parent=0 // pred_check_branch
    %410 = sbr.rel (0) target = $region21
  $region20: #{multi_stream_forward.1} parent=0 // pred_region
    _
  $region21: #{multi_stream_forward.1} parent=0 // pred_fallthru
    _
  // Predicated region
  $region22: #{multi_stream_forward.1} parent=0 // pred_check
    _
  $region23: #{multi_stream_forward.1} parent=0 // pred_check_branch
    %412 = sbr.rel (0) target = $region25
  $region24: #{multi_stream_forward.1} parent=0 // pred_region
    _
  $region25: #{multi_stream_forward.1} parent=0 // pred_fallthru
    _

</llo_original>
